<compile_context>
chip_gen: v7x
topology: tpu7x:2x2x1
jax: 0.10.0
libtpu: 0.0.40
codegen_flags: <defaults>
</compile_context>

<pallas_src>
import functools
import numpy as np
import jax
import jax.numpy as jnp
from jax import lax
from jax.experimental import pallas as pl
from jax.experimental.pallas import tpu as pltpu

EPS = 1e-5
M_BRANCHES = 3
K_SK = 15


# ---------------------------------------------------------------------------
# Pallas kernels
# ---------------------------------------------------------------------------
def _conv_bn_kernel(*refs, K, dil, relu, use_sel):
    """One batch element: conv1d (single im2col MXU dot) -> +bias -> ReLU -> BN.

    refs (use_sel=False): x(1,Cin,Lpad), w(Cout,K*Cin), b(Cout,1),
                          scale(Cout,1), shift(Cout,1), out(1,Cout,Lout)
    refs (use_sel=True):  ..., sel(L1,Lout), out(1,Cout,Lout)
                          stride-2 handled in-kernel: the stride-1 result is
                          column-selected by one tiny 0/1 matrix dot, so only
                          the strided output is written back to HBM.
    """
    if use_sel:
        x_ref, w_ref, b_ref, scale_ref, shift_ref, sel_ref, o_ref = refs
    else:
        x_ref, w_ref, b_ref, scale_ref, shift_ref, o_ref = refs
        sel_ref = None

    x = x_ref[0]                                             # (Cin, Lpad)
    l1 = sel_ref.shape[0] if use_sel else o_ref.shape[2]     # stride-1 length
    # im2col: stack K shifted views along the channel (sublane) axis -> one MXU
    # dot with contraction dim K*Cin instead of K tiny (Cout x Cin) tap-dots.
    cols = jnp.concatenate([x[:, t * dil:t * dil + l1] for t in range(K)],
                           axis=0)                           # (K*Cin, l1)
    acc = jnp.dot(w_ref[...], cols, preferred_element_type=jnp.float32)
    acc = acc + b_ref[...]
    if relu:
        acc = jnp.maximum(acc, 0.0)
    acc = acc * scale_ref[...] + shift_ref[...]              # BN affine (eval)
    if use_sel:                                              # stride-2 select
        acc = jnp.dot(acc, sel_ref[...], preferred_element_type=jnp.float32)
    o_ref[0] = acc


def _sk_attn_residual_kernel(*refs, C, K, d, dils, offs, L, has_skip_conv):
    """Fused SK1DConv (d dilated branches) + CRattention + residual, one batch.

    refs: hpad(1,C,L+2*pad_max), wsk(d,C,K*C), scale(d,C,1), shift(d,C,1),
          mix(d*C,d*C), skip(1,Cs,L), [skip_w(C,Cs)], out(1,C,L)
    """
    if has_skip_conv:
        (hpad_ref, wsk_ref, scale_ref, shift_ref, mix_ref, skip_ref,
         skipw_ref, o_ref) = refs
    else:
        hpad_ref, wsk_ref, scale_ref, shift_ref, mix_ref, skip_ref, o_ref = refs
        skipw_ref = None

    hp = hpad_ref[0]                                         # (C, L + 2*pad_max)
    inv_l = 1.0 / L
    branch, pooled = [], []
    for i in range(d):                                       # static unroll, d=3
        dil, off = dils[i], offs[i]
        cols = jnp.concatenate(
            [hp[:, off + t * dil: off + t * dil + L] for t in range(K)],
            axis=0)                                          # (K*C, L)
        a = jnp.dot(wsk_ref[i], cols, preferred_element_type=jnp.float32)
        a = jnp.maximum(a, 0.0)                              # ReLU (bias-free conv)
        a = a * scale_ref[i] + shift_ref[i]                  # BN affine
        branch.append(a)
        pooled.append(jnp.sum(a, axis=1, keepdims=True) * inv_l)   # avg pool

    p = jnp.concatenate(pooled, axis=0)                      # (d*C, 1)
    z = jnp.dot(mix_ref[...], p, preferred_element_type=jnp.float32)  # (d*C, 1)

    skip = skip_ref[0]                                       # (Cs, L)
    if has_skip_conv:                                        # 1x1 conv (no bias)
        skip = jnp.dot(skipw_ref[...], skip, preferred_element_type=jnp.float32)

    acc = skip
    for j in range(d):                                       # per-chunk softmax
        chunk = z[j * C:(j + 1) * C, :]                      # (C, 1)
        mx = jnp.max(chunk, axis=0, keepdims=True)
        e = jnp.exp(chunk - mx)
        w = e / jnp.sum(e, axis=0, keepdims=True)
        acc = acc + branch[j] * w                            # broadcast over L
    o_ref[0] = acc


# ---------------------------------------------------------------------------
# Pallas wrappers
# ---------------------------------------------------------------------------
def conv1d_bn_relu(x, w_flat, bias, scale, shift, *, K, stride=1, dilation=1,
                   padding=0, relu=True):
    """Conv1d (NCL) -> +bias -> optional ReLU -> BN affine, stride in-kernel."""
    B, Cin, L = x.shape
    Cout = w_flat.shape[0]
    xpad = jnp.pad(x, ((0, 0), (0, 0), (padding, padding)))
    Lpad = L + 2 * padding
    L1 = Lpad - (K - 1) * dilation                 # stride-1 output length
    Lout = (L1 - 1) // stride + 1
    use_sel = stride > 1

    inputs = [xpad, w_flat, bias, scale, shift]
    in_specs = [
        pl.BlockSpec((1, Cin, Lpad), lambda b: (b, 0, 0)),
        pl.BlockSpec((Cout, K * Cin), lambda b: (0, 0)),
        pl.BlockSpec((Cout, 1), lambda b: (0, 0)),
        pl.BlockSpec((Cout, 1), lambda b: (0, 0)),
        pl.BlockSpec((Cout, 1), lambda b: (0, 0)),
    ]
    if use_sel:
        sel = np.zeros((L1, Lout), np.float32)
        sel[np.arange(Lout) * stride, np.arange(Lout)] = 1.0
        inputs.append(jnp.asarray(sel))
        in_specs.append(pl.BlockSpec((L1, Lout), lambda b: (0, 0)))

    kern = functools.partial(_conv_bn_kernel, K=K, dil=dilation, relu=relu,
                             use_sel=use_sel)
    return pl.pallas_call(
        kern,
        out_shape=jax.ShapeDtypeStruct((B, Cout, Lout), jnp.float32),
        grid_spec=pltpu.PrefetchScalarGridSpec(
            num_scalar_prefetch=0,
            grid=(B,),
            in_specs=in_specs,
            out_specs=pl.BlockSpec((1, Cout, Lout), lambda b: (b, 0, 0)),
        ),
        compiler_params=pltpu.CompilerParams(dimension_semantics=("parallel",)),
    )(*inputs)


def sk_attention_residual(h, wsk, sk_scale, sk_shift, mix_mat, skip, skip_w,
                          *, K=K_SK, d=M_BRANCHES):
    """Fused SK branches + CRattention + (optional 1x1 skip conv) + residual."""
    B, C, L = h.shape
    dils = tuple(1 + i for i in range(d))
    pads = tuple((K + (K - 1) * i - 1) // 2 for i in range(d))
    pad_max = max(pads)
    offs = tuple(pad_max - p for p in pads)
    hpad = jnp.pad(h, ((0, 0), (0, 0), (pad_max, pad_max)))   # pad h ONCE
    Lp = L + 2 * pad_max
    Cs = skip.shape[1]
    has_skip_conv = skip_w is not None

    inputs = [hpad, wsk, sk_scale, sk_shift, mix_mat, skip]
    in_specs = [
        pl.BlockSpec((1, C, Lp), lambda b: (b, 0, 0)),
        pl.BlockSpec((d, C, K * C), lambda b: (0, 0, 0)),
        pl.BlockSpec((d, C, 1), lambda b: (0, 0, 0)),
        pl.BlockSpec((d, C, 1), lambda b: (0, 0, 0)),
        pl.BlockSpec((d * C, d * C), lambda b: (0, 0)),
        pl.BlockSpec((1, Cs, L), lambda b: (b, 0, 0)),
    ]
    if has_skip_conv:
        inputs.append(skip_w)
        in_specs.append(pl.BlockSpec((C, Cs), lambda b: (0, 0)))

    kern = functools.partial(_sk_attn_residual_kernel, C=C, K=K, d=d,
                             dils=dils, offs=offs, L=L,
                             has_skip_conv=has_skip_conv)
    return pl.pallas_call(
        kern,
        out_shape=jax.ShapeDtypeStruct((B, C, L), jnp.float32),
        grid_spec=pltpu.PrefetchScalarGridSpec(
            num_scalar_prefetch=0,
            grid=(B,),
            in_specs=in_specs,
            out_specs=pl.BlockSpec((1, C, L), lambda b: (b, 0, 0)),
        ),
        compiler_params=pltpu.CompilerParams(dimension_semantics=("parallel",)),
    )(*inputs)


# ---------------------------------------------------------------------------
# Parameter construction (deterministic, synthetic); packed for the kernels
# ---------------------------------------------------------------------------
def _bn_scale_shift(gamma, beta, mean, var):
    scale = gamma / jnp.sqrt(var + EPS)
    shift = beta - mean * scale
    return scale, shift


def _expand_grouped_weight(w_np, groups):
    # w_np: (Cout, Cin//groups, K) -> dense (Cout, Cin, K), zeros across groups.
    Cout, Cg, K = w_np.shape
    Cin = Cg * groups
    dense = np.zeros((Cout, Cin, K), np.float32)
    gsize_out = Cout // groups
    for co in range(Cout):
        g = co // gsize_out
        dense[co, g * Cg:(g + 1) * Cg, :] = w_np[co]
    return jnp.asarray(dense)


def _flatten_conv_weight(w):
    # (Cout, Cin, K) -> (Cout, K*Cin), tap-major to match the in-kernel im2col.
    Cout, Cin, K = w.shape
    return jnp.transpose(w, (0, 2, 1)).reshape(Cout, K * Cin)


def _build_mix_matrix(fc_w_np, C, d):
    # Z[n] = sum_k M[n, k] * avgpool[k]  (folds reshape/permute/fc/permute/chunk)
    M = np.zeros((d * C, d * C), np.float32)
    for n in range(d * C):
        e, ap = n % d, n // d
        for a in range(C):
            M[n, a * d + e] = fc_w_np[e, ap, a]
    return jnp.asarray(M)


def init_params(key, Cin, Cout, ks):
    ks_ = jax.random.split(key, 40)
    i = iter(range(40))
    rnd = lambda shape, s=0.1: jax.random.normal(ks_[next(i)], shape, jnp.float32) * s
    uni = lambda shape: jax.random.uniform(ks_[next(i)], shape, jnp.float32, 0.5, 1.5)

    raw = dict(Cin=Cin, Cout=Cout, ks=ks)
    raw['brc_w1'] = rnd((Cout, Cin, ks)); raw['brc_b1'] = rnd((Cout,))
    raw['bn1'] = (1.0 + rnd((Cout,)), rnd((Cout,)), rnd((Cout,)), uni((Cout,)))
    raw['brc_w2'] = rnd((Cout, Cout, ks)); raw['brc_b2'] = rnd((Cout,))
    raw['bn2'] = (1.0 + rnd((Cout,)), rnd((Cout,)), rnd((Cout,)), uni((Cout,)))
    raw['sk_w'] = [rnd((Cout, Cout // 2, K_SK)) for _ in range(M_BRANCHES)]
    raw['sk_bn'] = [(1.0 + rnd((Cout,)), rnd((Cout,)), rnd((Cout,)), uni((Cout,)))
                    for _ in range(M_BRANCHES)]
    raw['fc_w'] = jnp.stack([rnd((Cout, Cout)) for _ in range(M_BRANCHES)])
    raw['skip_w'] = rnd((Cout, Cin, 1))

    # All weight prep is hoisted here (done once, not per forward call).
    prm = dict(Cin=Cin, Cout=Cout, ks=ks)
    prm['brc_w1'] = _flatten_conv_weight(raw['brc_w1'])          # (Cout, ks*Cin)
    prm['brc_b1'] = raw['brc_b1'].reshape(Cout, 1)
    sc, sh = _bn_scale_shift(*raw['bn1'])
    prm['bn1_scale'], prm['bn1_shift'] = sc.reshape(Cout, 1), sh.reshape(Cout, 1)

    prm['brc_w2'] = _flatten_conv_weight(raw['brc_w2'])          # (Cout, ks*Cout)
    prm['brc_b2'] = raw['brc_b2'].reshape(Cout, 1)
    sc, sh = _bn_scale_shift(*raw['bn2'])
    prm['bn2_scale'], prm['bn2_shift'] = sc.reshape(Cout, 1), sh.reshape(Cout, 1)

    sk_dense = [_expand_grouped_weight(np.asarray(w), 2) for w in raw['sk_w']]
    prm['sk_w'] = jnp.stack([_flatten_conv_weight(w) for w in sk_dense])  # (3,Cout,K*Cout)
    sk_bn = [_bn_scale_shift(*bn) for bn in raw['sk_bn']]
    prm['sk_scale'] = jnp.stack([s for s, _ in sk_bn]).reshape(M_BRANCHES, Cout, 1)
    prm['sk_shift'] = jnp.stack([s for _, s in sk_bn]).reshape(M_BRANCHES, Cout, 1)

    prm['mix_mat'] = _build_mix_matrix(np.asarray(raw['fc_w']), Cout, M_BRANCHES)
    prm['skip_w'] = raw['skip_w'][:, :, 0]                        # (Cout, Cin)
    return raw, prm


# ---------------------------------------------------------------------------
# SK1Block forward (Pallas path): 3 pallas_calls total
# ---------------------------------------------------------------------------
def sk1block_forward(prm, x, *, down_sample=False):
    Cin, Cout, ks = prm['Cin'], prm['Cout'], prm['ks']
    stride = 2 if down_sample else 1
    pad = (ks - 1) // 2
    x = x.astype(jnp.float32)

    # BRC: conv -> relu -> bn -> conv -> relu -> bn  (each conv = one im2col dot)
    h = conv1d_bn_relu(x, prm['brc_w1'], prm['brc_b1'],
                       prm['bn1_scale'], prm['bn1_shift'],
                       K=ks, stride=stride, padding=pad, relu=True)
    h = conv1d_bn_relu(h, prm['brc_w2'], prm['brc_b2'],
                       prm['bn2_scale'], prm['bn2_shift'],
                       K=ks, stride=1, padding=pad, relu=True)

    # residual branch input (AvgPool1d(kernel=1, stride=2) == subsample)
    skip = x
    if down_sample:
        skip = skip[:, :, ::2]
    skip_w = prm['skip_w'] if Cin != Cout else None

    # Fused: 3 dilated SK branches + ReLU + BN + CRattention + 1x1 skip conv
    # + residual add, one kernel, h read once per batch element.
    return sk_attention_residual(h, prm['sk_w'], prm['sk_scale'], prm['sk_shift'],
                                 prm['mix_mat'], skip, skip_w)


# ---------------------------------------------------------------------------
# Pure-JAX reference (mirrors the PyTorch forward literally)
# ---------------------------------------------------------------------------
def _ref_conv1d(x, w, bias, stride, padding, dilation, groups):
    out = lax.conv_general_dilated(
        x, w, window_strides=(stride,), padding=[(padding, padding)],
        rhs_dilation=(dilation,), dimension_numbers=('NCH', 'OIH', 'NCH'),
        feature_group_count=groups)
    if bias is not None:
        out = out + bias[None, :, None]
    return out


def _ref_bn(x, gamma, beta, mean, var):
    return ((x - mean[None, :, None]) / jnp.sqrt(var[None, :, None] + EPS)
            * gamma[None, :, None] + beta[None, :, None])


def _ref_crattn(x, fc_w, C, d):
    b, c, _ = x.shape
    y1 = jnp.mean(x, axis=2)
    y4 = y1.reshape(b, C, d).transpose(0, 2, 1).reshape(b, c)
    attn = [y4[:, C * i:C * (i + 1)] @ fc_w[i].T for i in range(d)]
    Z = jnp.concatenate(attn, axis=1).reshape(b, d, C).transpose(0, 2, 1).reshape(b, c)
    res = 0.0
    for j in range(d):
        wj = jax.nn.softmax(Z[:, C * j:C * (j + 1)], axis=1)
        res = res + x[:, C * j:C * (j + 1), :] * wj[:, :, None]
    return res


def ref_sk1block(raw, x, *, down_sample=False):
    Cin, Cout, ks = raw['Cin'], raw['Cout'], raw['ks']
    stride = 2 if down_sample else 1
    pad = (ks - 1) // 2
    h = _ref_conv1d(x, raw['brc_w1'], raw['brc_b1'], stride, pad, 1, 1)
    h = _ref_bn(jax.nn.relu(h), *raw['bn1'])
    h = _ref_conv1d(h, raw['brc_w2'], raw['brc_b2'], 1, pad, 1, 1)
    h = _ref_bn(jax.nn.relu(h), *raw['bn2'])
    outs = []
    for i in range(M_BRANCHES):
        dil = 1 + i
        p = (K_SK + (K_SK - 1) * i - 1) // 2
        o = _ref_conv1d(h, raw['sk_w'][i], None, 1, p, dil, 2)
        outs.append(_ref_bn(jax.nn.relu(o), *raw['sk_bn'][i]))
    s1 = jnp.concatenate(outs, axis=1)
    x2 = _ref_crattn(s1, raw['fc_w'], Cout, M_BRANCHES)
    skip = x
    if down_sample:
        skip = skip[:, :, ::2]
    if Cin != Cout:
        skip = _ref_conv1d(skip, raw['skip_w'], None, 1, 0, 1, 1)
    return x2 + skip


# ---------------------------------------------------------------------------
if __name__ == "__main__":
    B, Cin, Cout, L, KS = 2, 4, 8, 32, 3
    key = jax.random.PRNGKey(0)
    k_param, k_x = jax.random.split(key)
    raw, prm = init_params(k_param, Cin, Cout, KS)
    x = jax.random.normal(k_x, (B, Cin, L), jnp.float32)

    for ds in (False, True):
        out = jax.block_until_ready(sk1block_forward(prm, x, down_sample=ds))
        ref = jax.block_until_ready(ref_sk1block(raw, x, down_sample=ds))
        np.testing.assert_allclose(np.asarray(out), np.asarray(ref),
                                   rtol=2e-3, atol=2e-3)

    print("KERNEL_OK")
</pallas_src>

<mosaic_0001>
module attributes {stable_mosaic.version = 11 : i64} {
  func.func @_conv_bn_kernel(%arg0: i32, %arg1: memref<1x4x34xf32, #tpu.memory_space<vmem>>, %arg2: memref<8x12xf32, #tpu.memory_space<vmem>>, %arg3: memref<8x1xf32, #tpu.memory_space<vmem>>, %arg4: memref<8x1xf32, #tpu.memory_space<vmem>>, %arg5: memref<8x1xf32, #tpu.memory_space<vmem>>, %arg6: memref<1x8x32xf32, #tpu.memory_space<vmem>>) attributes {dimension_semantics = [#tpu.dimension_semantics<parallel>], iteration_bounds = array<i64: 2>, scalar_prefetch = 0 : i64, scratch_operands = 0 : i64, tpu.core_type = #tpu.core_type<tc>, window_params = [{transform_indices = @transform_0, window_bounds = array<i64: 1, 4, 34>}, {pipeline_mode = #tpu.pipeline_mode<synchronous>, transform_indices = @transform_1, window_bounds = array<i64: 8, 12>}, {pipeline_mode = #tpu.pipeline_mode<synchronous>, transform_indices = @transform_2, window_bounds = array<i64: 8, 1>}, {pipeline_mode = #tpu.pipeline_mode<synchronous>, transform_indices = @transform_3, window_bounds = array<i64: 8, 1>}, {pipeline_mode = #tpu.pipeline_mode<synchronous>, transform_indices = @transform_4, window_bounds = array<i64: 8, 1>}, {transform_indices = @transform_5, window_bounds = array<i64: 1, 8, 32>}]} {
    %c0 = arith.constant 0 : index
    %c0_0 = arith.constant 0 : index
    %c0_1 = arith.constant 0 : index
    %0 = vector.load %arg1[%c0, %c0_0, %c0_1] : memref<1x4x34xf32, #tpu.memory_space<vmem>>, vector<1x4x34xf32>
    %1 = vector.shape_cast %0 : vector<1x4x34xf32> to vector<4x34xf32>
    %2 = vector.extract_strided_slice %1 {offsets = [0, 0], sizes = [4, 32], strides = [1, 1]} : vector<4x34xf32> to vector<4x32xf32>
    %3 = vector.extract_strided_slice %1 {offsets = [0, 1], sizes = [4, 32], strides = [1, 1]} : vector<4x34xf32> to vector<4x32xf32>
    %4 = vector.extract_strided_slice %1 {offsets = [0, 2], sizes = [4, 32], strides = [1, 1]} : vector<4x34xf32> to vector<4x32xf32>
    %5 = tpu.concatenate %2, %3, %4 in 0 : vector<4x32xf32>, vector<4x32xf32>, vector<4x32xf32> -> vector<12x32xf32>
    %c0_2 = arith.constant 0 : index
    %c0_3 = arith.constant 0 : index
    %6 = vector.load %arg2[%c0_2, %c0_3] : memref<8x12xf32, #tpu.memory_space<vmem>>, vector<8x12xf32>
    %cst = arith.constant dense<0.000000e+00> : vector<8x32xf32>
    %7 = tpu.matmul %6, %5, %cst {dimension_numbers = #tpu.dot_dimension_numbers<[1], [0], [0], [1], [0, 0, 1, 1], [], []>} : vector<8x12xf32>, vector<12x32xf32>, vector<8x32xf32> -> vector<8x32xf32>
    %c0_4 = arith.constant 0 : index
    %c0_5 = arith.constant 0 : index
    %8 = vector.load %arg3[%c0_4, %c0_5] : memref<8x1xf32, #tpu.memory_space<vmem>>, vector<8x1xf32>
    %9 = vector.broadcast %8 : vector<8x1xf32> to vector<8x32xf32>
    %10 = arith.addf %7, %9 : vector<8x32xf32>
    %cst_6 = arith.constant 0.000000e+00 : f32
    %11 = vector.broadcast %cst_6 : f32 to vector<8x32xf32>
    %12 = arith.maximumf %10, %11 : vector<8x32xf32>
    %c0_7 = arith.constant 0 : index
    %c0_8 = arith.constant 0 : index
    %13 = vector.load %arg4[%c0_7, %c0_8] : memref<8x1xf32, #tpu.memory_space<vmem>>, vector<8x1xf32>
    %14 = vector.broadcast %13 : vector<8x1xf32> to vector<8x32xf32>
    %15 = arith.mulf %12, %14 : vector<8x32xf32>
    %c0_9 = arith.constant 0 : index
    %c0_10 = arith.constant 0 : index
    %16 = vector.load %arg5[%c0_9, %c0_10] : memref<8x1xf32, #tpu.memory_space<vmem>>, vector<8x1xf32>
    %17 = vector.broadcast %16 : vector<8x1xf32> to vector<8x32xf32>
    %18 = arith.addf %15, %17 : vector<8x32xf32>
    %c0_11 = arith.constant 0 : index
    %c0_12 = arith.constant 0 : index
    %c0_13 = arith.constant 0 : index
    %19 = vector.load %arg6[%c0_11, %c0_12, %c0_13] : memref<1x8x32xf32, #tpu.memory_space<vmem>>, vector<1x8x32xf32>
    %20 = vector.shape_cast %19 : vector<1x8x32xf32> to vector<8x32xf32>
    %21 = vector.shape_cast %18 : vector<8x32xf32> to vector<1x8x32xf32>
    tpu.vector_store %arg6[%c0_11, %c0_12, %c0_13], %21 {strides = array<i32>} : memref<1x8x32xf32, #tpu.memory_space<vmem>>, vector<1x8x32xf32>,
    return
  }
  func.func @transform_0(%arg0: i32) -> (i32, i32, i32) {
    %c0_i32 = arith.constant 0 : i32
    %c0_i32_0 = arith.constant 0 : i32
    %c0_i32_1 = arith.constant 0 : i32
    return %arg0, %c0_i32, %c0_i32_0 : i32, i32, i32
  }
  func.func @transform_1(%arg0: i32) -> (i32, i32) {
    %c0_i32 = arith.constant 0 : i32
    %c0_i32_0 = arith.constant 0 : i32
    %c0_i32_1 = arith.constant 0 : i32
    return %c0_i32, %c0_i32_0 : i32, i32
  }
  func.func @transform_2(%arg0: i32) -> (i32, i32) {
    %c0_i32 = arith.constant 0 : i32
    %c0_i32_0 = arith.constant 0 : i32
    %c0_i32_1 = arith.constant 0 : i32
    return %c0_i32, %c0_i32_0 : i32, i32
  }
  func.func @transform_3(%arg0: i32) -> (i32, i32) {
    %c0_i32 = arith.constant 0 : i32
    %c0_i32_0 = arith.constant 0 : i32
    %c0_i32_1 = arith.constant 0 : i32
    return %c0_i32, %c0_i32_0 : i32, i32
  }
  func.func @transform_4(%arg0: i32) -> (i32, i32) {
    %c0_i32 = arith.constant 0 : i32
    %c0_i32_0 = arith.constant 0 : i32
    %c0_i32_1 = arith.constant 0 : i32
    return %c0_i32, %c0_i32_0 : i32, i32
  }
  func.func @transform_5(%arg0: i32) -> (i32, i32, i32) {
    %c0_i32 = arith.constant 0 : i32
    %c0_i32_0 = arith.constant 0 : i32
    %c0_i32_1 = arith.constant 0 : i32
    return %arg0, %c0_i32, %c0_i32_0 : i32, i32, i32
  }
}

</mosaic_0001>

<llo_original>
// kernel: tpu_custom_call.1
$region0: #{tpu_custom_call.1}
  #allocation0 [shape = 'u32[]', space=smem, size = 0x4, offset = 0x4, fixed_abs, tag = 'smem constant byte address 0x4 - core index']
  #allocation1 [shape = 'u32[144,128]{1,0:T(1,128)}', space=vmem, size = 0x12000, scoped, tag = 'internal scratch']
  %s0 = inlined_call_operand.vmem [shape: f32[2,4,34], index: 0, kind: input, shape index: {}]
  %s1 = inlined_call_operand.vmem [shape: f32[8,12], index: 1, kind: input, shape index: {}]
  %s2 = inlined_call_operand.vmem [shape: f32[8,1], index: 2, kind: input, shape index: {}]
  %s3 = inlined_call_operand.vmem [shape: f32[8,1], index: 3, kind: input, shape index: {}]
  %s4 = inlined_call_operand.vmem [shape: f32[8,1], index: 4, kind: input, shape index: {}]
  %s5 = inlined_call_operand.hbm [shape: f32[2,8,32], index: 5, kind: output, shape index: {}]
  %s6 = sld [smem:[#allocation0]]
  $region53: #{tpu_custom_call.1} parent=0
    _
  %s8 = ssub.s32 1, %s6
  %s9 = scalar_select 0, %s8, %s6
  $region1: #{tpu_custom_call.1} parent=0
    #allocation2 [shape = 'u8[8192]{0}', space=vmem, size = 0x2000, scoped, tag = 'output window, operand 0']
    #allocation3 [shape = 's32[2]{0}', space=sflag, size = 0x8, scoped, tag = 'scoped memory for tpu_custom_call.1']
    %10 = vsyncpa [#allocation3], 0
    %s11 = scalar_lea.sflag [#allocation3], 1
    %12 = vsyncpa %s11, 0
    loop: start=0, step=1, limit=4
    $region2: #{tpu_custom_call.1} parent=1 // loop_pre_header
      _
    $region3: #{tpu_custom_call.1} parent=1 // loop_header
      %s14 = sphi 0, %s18
      %p15 = scmp.ge.s32.totalorder %s14, 4
      %s24 = sphi 0, %s26
      %s27 = sphi 0, %s24
      %s28 = sphi 0, %s27
      %s44 = sphi 0, %s28
      %s48 = sphi 0, %s48
      %s50 = sphi 0, %s48
      %s51 = sphi 0, %s50
      %s65 = sphi 0, %s51
      %s69 = sphi 0, %s69
      %s71 = sphi 0, %s69
      %s72 = sphi 0, %s71
      %s86 = sphi 0, %s72
      %s90 = sphi 0, %s90
      %s92 = sphi 0, %s90
      %s93 = sphi 0, %s92
      %s107 = sphi 0, %s93
      %s111 = sphi 0, %s111
      %s113 = sphi 0, %s111
      %s114 = sphi 0, %s113
      %s128 = sphi 0, %s114
      %s134 = sphi 0, %s136
      %s137 = sphi 0, %s134
      %s138 = sphi 0, %s137
      %s154 = sphi 0, %s138
    $region4: #{tpu_custom_call.1} parent=1 // loop_header_branch
      %17 = sbr.rel (%p15) target = $region8
    $region5: #{tpu_custom_call.1} parent=1 // loop_body
      %s19 = ssub.s32 %s14, 1
      %s20 = ssub.s32 %s14, 2
      %s21 = sadd.s32 %s14, 1
      %s22 = ssub.s32 %s14, %s21
      %p23 = scmp.eq.s32.totalorder %s22, 0
      %s25 = sadd.s32 %s24, 1
      %s26 = scalar_select %p23, %s24, %s25
      %p29 = pneg %p23
      %p30 = scmp.eq.s32.totalorder %s14, 1
      %p31 = por %p29, %p30
      %p32 = scmp.ne.s32.totalorder %s24, %s27
      %p33 = scmp.eq.s32.totalorder %s14, 0
      %p34 = por %p32, %p33
      %p35 = scmp.ne.s32.totalorder %s24, %s27
      %p36 = scmp.eq.s32.totalorder %s19, 1
      %p37 = por %p35, %p36
      %p38 = scmp.ne.s32.totalorder %s27, %s28
      %p39 = scmp.eq.s32.totalorder %s19, 0
      %p40 = por %p38, %p39
      %p41 = scmp.ne.s32.totalorder %s27, %s28
      %p42 = scmp.eq.s32.totalorder %s20, 1
      %p43 = por %p41, %p42
      %p45 = scmp.ne.s32.totalorder %s28, %s44
      %p46 = scmp.eq.s32.totalorder %s20, 0
      %p47 = por %p45, %p46
      %s49 = sadd.s32 %s48, 1
      %p52 = scmp.eq.s32.totalorder %s14, 1
      %p53 = scmp.ne.s32.totalorder %s48, %s50
      %p54 = scmp.eq.s32.totalorder %s14, 0
      %p55 = por %p53, %p54
      %p56 = scmp.ne.s32.totalorder %s48, %s50
      %p57 = scmp.eq.s32.totalorder %s19, 1
      %p58 = por %p56, %p57
      %p59 = scmp.ne.s32.totalorder %s50, %s51
      %p60 = scmp.eq.s32.totalorder %s19, 0
      %p61 = por %p59, %p60
      %p62 = scmp.ne.s32.totalorder %s50, %s51
      %p63 = scmp.eq.s32.totalorder %s20, 1
      %p64 = por %p62, %p63
      %p66 = scmp.ne.s32.totalorder %s51, %s65
      %p67 = scmp.eq.s32.totalorder %s20, 0
      %p68 = por %p66, %p67
      %s70 = sadd.s32 %s69, 1
      %p73 = scmp.eq.s32.totalorder %s14, 1
      %p74 = scmp.ne.s32.totalorder %s69, %s71
      %p75 = scmp.eq.s32.totalorder %s14, 0
      %p76 = por %p74, %p75
      %p77 = scmp.ne.s32.totalorder %s69, %s71
      %p78 = scmp.eq.s32.totalorder %s19, 1
      %p79 = por %p77, %p78
      %p80 = scmp.ne.s32.totalorder %s71, %s72
      %p81 = scmp.eq.s32.totalorder %s19, 0
      %p82 = por %p80, %p81
      %p83 = scmp.ne.s32.totalorder %s71, %s72
      %p84 = scmp.eq.s32.totalorder %s20, 1
      %p85 = por %p83, %p84
      %p87 = scmp.ne.s32.totalorder %s72, %s86
      %p88 = scmp.eq.s32.totalorder %s20, 0
      %p89 = por %p87, %p88
      %s91 = sadd.s32 %s90, 1
      %p94 = scmp.eq.s32.totalorder %s14, 1
      %p95 = scmp.ne.s32.totalorder %s90, %s92
      %p96 = scmp.eq.s32.totalorder %s14, 0
      %p97 = por %p95, %p96
      %p98 = scmp.ne.s32.totalorder %s90, %s92
      %p99 = scmp.eq.s32.totalorder %s19, 1
      %p100 = por %p98, %p99
      %p101 = scmp.ne.s32.totalorder %s92, %s93
      %p102 = scmp.eq.s32.totalorder %s19, 0
      %p103 = por %p101, %p102
      %p104 = scmp.ne.s32.totalorder %s92, %s93
      %p105 = scmp.eq.s32.totalorder %s20, 1
      %p106 = por %p104, %p105
      %p108 = scmp.ne.s32.totalorder %s93, %s107
      %p109 = scmp.eq.s32.totalorder %s20, 0
      %p110 = por %p108, %p109
      %s112 = sadd.s32 %s111, 1
      %p115 = scmp.eq.s32.totalorder %s14, 1
      %p116 = scmp.ne.s32.totalorder %s111, %s113
      %p117 = scmp.eq.s32.totalorder %s14, 0
      %p118 = por %p116, %p117
      %p119 = scmp.ne.s32.totalorder %s111, %s113
      %p120 = scmp.eq.s32.totalorder %s19, 1
      %p121 = por %p119, %p120
      %p122 = scmp.ne.s32.totalorder %s113, %s114
      %p123 = scmp.eq.s32.totalorder %s19, 0
      %p124 = por %p122, %p123
      %p125 = scmp.ne.s32.totalorder %s113, %s114
      %p126 = scmp.eq.s32.totalorder %s20, 1
      %p127 = por %p125, %p126
      %p129 = scmp.ne.s32.totalorder %s114, %s128
      %p130 = scmp.eq.s32.totalorder %s20, 0
      %p131 = por %p129, %p130
      %s132 = ssub.s32 %s14, %s21
      %p133 = scmp.eq.s32.totalorder %s132, 0
      %s135 = sadd.s32 %s134, 1
      %s136 = scalar_select %p133, %s134, %s135
      %p139 = pneg %p133
      %p140 = scmp.eq.s32.totalorder %s14, 1
      %p141 = por %p139, %p140
      %p142 = scmp.ne.s32.totalorder %s134, %s137
      %p143 = scmp.eq.s32.totalorder %s14, 0
      %p144 = por %p142, %p143
      %p145 = scmp.ne.s32.totalorder %s134, %s137
      %p146 = scmp.eq.s32.totalorder %s19, 1
      %p147 = por %p145, %p146
      %p148 = scmp.ne.s32.totalorder %s137, %s138
      %p149 = scmp.eq.s32.totalorder %s19, 0
      %p150 = por %p148, %p149
      %p151 = scmp.ne.s32.totalorder %s137, %s138
      %p152 = scmp.eq.s32.totalorder %s20, 1
      %p153 = por %p151, %p152
      %p155 = scmp.ne.s32.totalorder %s138, %s154
      %p156 = scmp.eq.s32.totalorder %s20, 0
      %p157 = por %p155, %p156
      %p158 = scmp.le.s32.totalorder 1, %s14
      %p159 = scmp.lt.s32.totalorder %s14, 3
      %p160 = pnand %p158, %p159
      %p161 = pneg %p160
      // Predicated region
      $region9: #{tpu_custom_call.1} parent=5 // pred_check
        _
      $region10: #{tpu_custom_call.1} parent=5 // pred_check_branch
        %163 = sbr.rel (%p160) target = $region12
      $region11: #{tpu_custom_call.1} parent=5 // pred_region
        %s164 = ssub.s32 %s14, 1
        // Predicated region
        $region13: #{tpu_custom_call.1} parent=11 // pred_check
          %p165 = pneg %p61
        $region14: #{tpu_custom_call.1} parent=11 // pred_check_branch
          %167 = sbr.rel (%p165) target = $region16
        $region15: #{tpu_custom_call.1} parent=11 // pred_region
          _
        $region16: #{tpu_custom_call.1} parent=11 // pred_fallthru
          _
        // Predicated region
        $region17: #{tpu_custom_call.1} parent=11 // pred_check
          %p168 = pneg %p82
        $region18: #{tpu_custom_call.1} parent=11 // pred_check_branch
          %170 = sbr.rel (%p168) target = $region20
        $region19: #{tpu_custom_call.1} parent=11 // pred_region
          _
        $region20: #{tpu_custom_call.1} parent=11 // pred_fallthru
          _
        // Predicated region
        $region21: #{tpu_custom_call.1} parent=11 // pred_check
          %p171 = pneg %p103
        $region22: #{tpu_custom_call.1} parent=11 // pred_check_branch
          %173 = sbr.rel (%p171) target = $region24
        $region23: #{tpu_custom_call.1} parent=11 // pred_region
          _
        $region24: #{tpu_custom_call.1} parent=11 // pred_fallthru
          _
        // Predicated region
        $region25: #{tpu_custom_call.1} parent=11 // pred_check
          %p174 = pneg %p124
        $region26: #{tpu_custom_call.1} parent=11 // pred_check_branch
          %176 = sbr.rel (%p174) target = $region28
        $region27: #{tpu_custom_call.1} parent=11 // pred_region
          _
        $region28: #{tpu_custom_call.1} parent=11 // pred_fallthru
          _
      $region12: #{tpu_custom_call.1} parent=5 // pred_fallthru
        _
      %p177 = scmp.lt.s32.totalorder %s14, 2
      // Predicated region
      $region29: #{tpu_custom_call.1} parent=5 // pred_check
        %p178 = pneg %p177
      $region30: #{tpu_custom_call.1} parent=5 // pred_check_branch
        %180 = sbr.rel (%p178) target = $region32
      $region31: #{tpu_custom_call.1} parent=5 // pred_region
        // Predicated region
        $region33: #{tpu_custom_call.1} parent=31 // pred_check
          %p181 = pneg %p34
        $region34: #{tpu_custom_call.1} parent=31 // pred_check_branch
          %183 = sbr.rel (%p181) target = $region36
        $region35: #{tpu_custom_call.1} parent=31 // pred_region
          %p184 = scmp.lt.s32.totalorder %s14, 1
          %s185 = scalar_select %p184, %s14, 1
          %s186 = smul.addr %s185, 4
          %s187 = scalar_lea.vmem %s0, %s186
        $region36: #{tpu_custom_call.1} parent=31 // pred_fallthru
          _
      $region32: #{tpu_custom_call.1} parent=5 // pred_fallthru
        _
      %p188 = scmp.le.s32.totalorder 1, %s14
      %p189 = scmp.lt.s32.totalorder %s14, 3
      %p190 = pnand %p188, %p189
      %p191 = pneg %p190
      // Predicated region
      $region37: #{tpu_custom_call.1} parent=5 // pred_check
        _
      $region38: #{tpu_custom_call.1} parent=5 // pred_check_branch
        %193 = sbr.rel (%p190) target = $region40
      $region39: #{tpu_custom_call.1} parent=5 // pred_region
        %s194 = ssub.s32 %s14, 1
        %p195 = scmp.lt.s32.totalorder %s19, 1
        %s196 = scalar_select %p195, %s19, 1
        %s197 = smul.addr %s196, 4
        %s198 = scalar_lea.vmem %s0, %s197
        %p199 = pneg %p40
        %p200 = pneg %p37
        %p201 = pneg %p61
        %p202 = pneg %p58
        %p203 = pneg %p82
        %p204 = pneg %p79
        %p205 = pneg %p103
        %p206 = pneg %p100
        %p207 = pneg %p124
        %p208 = pneg %p121
        %p209 = pneg %p150
        %p210 = pneg %p147
        %s211 = sand.u32 %s137, 1
        %s212 = scalar_lea.sflag [#allocation3], %s211
        %s213 = sand.u32 %s137, 1
        %s214 = smul.addr %s213, 8
        %s215 = scalar_lea.vmem [#allocation2], %s214
        %p216 = scmp.lt.s32.totalorder %s19, 1
        %s217 = scalar_select %p216, %s19, 1
        %s218 = smul.addr %s217, 4
        %s219 = scalar_lea.vmem %s0, %s218
        %v220 = vld [vmem:[%s219] sm:$0xf]
        %v222 = vrot.slane %v220, 4
        %223 = vrot.lane.b32.xlu0 %v222, 127
        %v224 = vpop.permute.xlu0 %223
        %226 = vrot.lane.b32.xlu0 %v220, 126
        %v227 = vpop.permute.xlu0 %226
        %vm228 = vcmask 1043456
        %v229 = vsel %vm228, %v220, %v224
        %v230 = vld [vmem:[%s1] sm:$0xff]
        %v231 = vld [vmem:[%s2] sm:$0xff]
        %233 = vset.pattern.permute.xlu0 0
        %234 = vperm.xlu0 %233, %v231
        %v235 = vpop.permute.xlu0 %234
        %vm237 = vcmask 97280
        %v239 = vsel %vm237, %v230, 0
        %v241 = vsel %vm228, %v227, 0
        %243 = vmatprep.subr.mxu0 0.0
        %244 = vmatpush1.msra.mxu0 %v229
        %245 = vmatprep.subr.mxu0 0.0
        %246 = vmatpush1.msra.mxu0 %v241
        %247 = vmatprep.subr.mxu0 0.0
        %248 = vmatpush1.msra.mxu0 0.0
        %249 = vmatprep.subr.mxu0 0.0
        %250 = vmatpush1.msra.mxu0 0.0
        %251 = vmatprep.subr.mxu0 0.0
        %252 = vmatpush1.msra.mxu0 0.0
        %253 = vmatprep.subr.mxu0 0.0
        %254 = vmatpush1.msra.mxu0 0.0
        %255 = vmatprep.subr.mxu0 0.0
        %256 = vmatpush1.msra.mxu0 0.0
        %257 = vmatprep.subr.mxu0 0.0
        %258 = vmatpush1.msra.mxu0 0.0
        %259 = vmatprep.subr.mxu0 0.0
        %260 = vmatpush1.msra.mxu0 0.0
        %261 = vmatprep.subr.mxu0 0.0
        %262 = vmatpush1.msra.mxu0 0.0
        %263 = vmatprep.subr.mxu0 0.0
        %264 = vmatpush1.msra.mxu0 0.0
        %265 = vmatprep.subr.mxu0 0.0
        %266 = vmatpush1.msra.mxu0 0.0
        %267 = vmatprep.subr.mxu0 0.0
        %268 = vmatpush1.msra.mxu0 0.0
        %269 = vmatprep.subr.mxu0 0.0
        %270 = vmatpush1.msra.mxu0 0.0
        %271 = vmatprep.subr.mxu0 0.0
        %272 = vmatpush1.msra.mxu0 0.0
        %273 = vmatprep.subr.mxu0 0.0
        %274 = vmatpush1.msra.mxu0 0.0
        %275 = vmatprep.subr.mxu0 0.0
        %276 = vmatpush1.msra.mxu0 0.0
        %277 = vmatprep.subr.mxu0 0.0
        %278 = vmatpush1.msra.mxu0 0.0
        %279 = vmatprep.subr.mxu0 0.0
        %280 = vmatpush1.msra.mxu0 0.0
        %281 = vmatprep.subr.mxu0 0.0
        %282 = vmatpush1.msra.mxu0 0.0
        %283 = vmatprep.subr.mxu0 0.0
        %284 = vmatpush1.msra.mxu0 0.0
        %285 = vmatprep.subr.mxu0 0.0
        %286 = vmatpush1.msra.mxu0 0.0
        %287 = vmatprep.subr.mxu0 0.0
        %288 = vmatpush1.msra.mxu0 0.0
        %289 = vmatprep.subr.mxu0 0.0
        %290 = vmatpush1.msra.mxu0 0.0
        %291 = vmatprep.subr.mxu0 0.0
        %292 = vmatpush1.msra.mxu0 0.0
        %293 = vmatprep.subr.mxu0 0.0
        %294 = vmatpush1.msra.mxu0 0.0
        %295 = vmatprep.subr.mxu0 0.0
        %296 = vmatpush1.msra.mxu0 0.0
        %297 = vmatprep.subr.mxu0 0.0
        %298 = vmatpush1.msra.mxu0 0.0
        %299 = vmatprep.subr.mxu0 0.0
        %300 = vmatpush1.msra.mxu0 0.0
        %301 = vmatprep.subr.mxu0 0.0
        %302 = vmatpush1.msra.mxu0 0.0
        %303 = vmatprep.subr.mxu0 0.0
        %304 = vmatpush1.msra.mxu0 0.0
        %305 = vmatprep.subr.mxu0 0.0
        %306 = vmatpush1.msra.mxu0 0.0
        %307 = vmatprep.mubr.f32.mxu0 0.0
        %308 = vmatmul.mubr.f32.gmra.mrb[0].mxu0 %v239
        %v309 = vpop.f32.mrb[0].mxu0
        %v310 = vadd.f32 %v235, %v309
        %v311 = vpop.f32.mrb[0].mxu0
        %312 = vdwg.mxu0
        %v313 = vmax.f32 %v310, 0.0
        %v314 = vld [vmem:[%s3] sm:$0xff]
        %316 = vset.pattern.permute.xlu0 0
        %317 = vperm.xlu0 %316, %v314
        %v318 = vpop.permute.xlu0 %317
        %v320 = vmul.f32 %v313, %v318
        %v321 = vld [vmem:[%s4] sm:$0xff]
        %323 = vset.pattern.permute.xlu0 0
        %324 = vperm.xlu0 %323, %v321
        %v325 = vpop.permute.xlu0 %324
        %v327 = vadd.f32 %v320, %v325
        %vm328 = vcmask 261120
        %329 = vst.msk [vmem:[%s215] sm:$0xff] %vm328, %v327
        %s330 = sand.u32 %s137, 1
        %s331 = scalar_lea.sflag [#allocation3], %s330
        %s332 = sand.u32 %s137, 1
        %s333 = smul.addr %s332, 8
        %s334 = scalar_lea.vmem [#allocation2], %s333
        // Predicated region
        $region41: #{tpu_custom_call.1} parent=39 // pred_check
          %p335 = pneg %p147
        $region42: #{tpu_custom_call.1} parent=39 // pred_check_branch
          %337 = sbr.rel (%p335) target = $region44
        $region43: #{tpu_custom_call.1} parent=39 // pred_region
          %s339 = ssub.s32 128, 128
          %340 = vsyncadd %s331, %s339
          %s341 = smul.addr %s19, 128
          %s342 = scalar_lea.hbm %s5, %s341
          %s344 = sshll.u32 %s334, 4
          %s345 = int_to_ptr.vmem [resolvable:$true] %s344
          %347 = dma.vmem_to_hbm [thread:$0]  %s345, 128, %s342, %s331
        $region44: #{tpu_custom_call.1} parent=39 // pred_fallthru
          _
      $region40: #{tpu_custom_call.1} parent=5 // pred_fallthru
        _
      %p348 = scmp.le.s32.totalorder 2, %s14
      // Predicated region
      $region45: #{tpu_custom_call.1} parent=5 // pred_check
        %p349 = pneg %p348
      $region46: #{tpu_custom_call.1} parent=5 // pred_check_branch
        %351 = sbr.rel (%p349) target = $region48
      $region47: #{tpu_custom_call.1} parent=5 // pred_region
        %s352 = ssub.s32 %s14, 2
        // Predicated region
        $region49: #{tpu_custom_call.1} parent=47 // pred_check
          %p353 = pneg %p153
        $region50: #{tpu_custom_call.1} parent=47 // pred_check_branch
          %355 = sbr.rel (%p353) target = $region52
        $region51: #{tpu_custom_call.1} parent=47 // pred_region
          %s356 = sand.u32 %s138, 1
          %s357 = scalar_lea.sflag [#allocation3], %s356
          %s358 = sand.u32 %s138, 1
          %s359 = smul.addr %s358, 8
          %s360 = scalar_lea.vmem [#allocation2], %s359
          %361 = dma.done %s357, 128
        $region52: #{tpu_custom_call.1} parent=47 // pred_fallthru
          _
      $region48: #{tpu_custom_call.1} parent=5 // pred_fallthru
        _
    $region6: #{tpu_custom_call.1} parent=1 // loop_footer
      %s18 = sadd.s32 1, %s14
    $region7: #{tpu_custom_call.1} parent=1 // loop_footer_branch
      %13 = sbr.rel target = $region3
    $region8: #{tpu_custom_call.1} parent=1 // loop_exit
      _
    %362 = vsyncpa [#allocation3], 1
    %s363 = scalar_lea.sflag [#allocation3], 1
    %364 = vsyncpa %s363, 1

</llo_original>
